<compile_context>
chip_gen: v7x
topology: tpu7x:2x2x1
jax: 0.10.0
libtpu: 0.0.40
codegen_flags: <defaults>
</compile_context>

<pallas_src>
import numpy as np
import jax
import jax.numpy as jnp
from jax import lax
from jax.experimental import pallas as pl
from jax.experimental.pallas import tpu as pltpu

SELU_ALPHA = 1.6732632423543772
SELU_SCALE = 1.0507009873554805
GN_EPS = 1e-5


def _make_kernel(Ho, Wo, nConv, nIn, nIn8, nOut, cpg, use_pool, bn):
    K = 9 * nIn8
    inv_cnt = 1.0 / float(cpg * Ho * Wo)

    def group_sums(v):
        # v: (nOut, 1) per-channel sums -> per-channel *group* sums.
        if cpg == 1:
            return v                                  # groups == channels: identity
        # tiny iota-built membership matvec (no DMA'd input); negligible vs the conv
        r = lax.broadcasted_iota(jnp.int32, (nOut, nOut), 0) // cpg
        c = lax.broadcasted_iota(jnp.int32, (nOut, nOut), 1) // cpg
        p = (r == c).astype(jnp.float32)
        return jnp.dot(p, v, preferred_element_type=jnp.float32)

    def kernel(ph_ref, w_ref, g_ref, b_ref, o_ref, y_scr):
        # ph_ref : (bn, 4, Ho+1, nIn8, Wo+1) bf16   stride-2 parity phases, row-slab
        # w_ref  : (nConv, 9*nIn8)           bf16   per-tap-flattened conv weight
        # g_ref  : (1, nOut, 1) f32 ; b_ref : (1, nOut, 1) f32
        # o_ref  : (bn, nOut, Ho, Wo) f32    NCHW output block
        # y_scr  : (Ho, nOut, Wo) f32        row-major per-sample scratch
        wmat = w_ref[...]

        for s in range(bn):
            # ---- pass A: per output row, one fused K=9*nIn8 matmul + pool -------
            def row_body(i, carry):
                pieces, pool_pieces = [], []
                for kh in range(3):
                    for kw in range(3):
                        phase = (kh % 2) * 2 + (kw % 2)
                        r0, c0 = kh // 2, kw // 2
                        # tap(kh,kw) row i == x_pad[:, 2i+kh, 2j+kw]  (static col slice,
                        # dynamic row index on an *outer* dim -> cheap addressing)
                        piece = ph_ref[s, phase, i + r0, :, c0:c0 + Wo]   # (nIn8, Wo)
                        pieces.append(piece)
                        if use_pool and kh >= 1 and kw >= 1:
                            # MaxPool2d(2,2) taps are exactly the (kh,kw) in {1,2}^2 taps
                            pool_pieces.append(piece[:nIn].astype(jnp.float32))
                slab = jnp.concatenate(pieces, axis=0)                    # (K, Wo) bf16
                conv_row = jnp.dot(wmat, slab,
                                   preferred_element_type=jnp.float32)    # (nConv, Wo)
                if use_pool:
                    pool_row = pool_pieces[0]
                    for pp in pool_pieces[1:]:
                        pool_row = jnp.maximum(pool_row, pp)
                    row = jnp.concatenate([conv_row, pool_row], axis=0)   # (nOut, Wo)
                else:
                    row = conv_row
                y_scr[i] = row
                return carry

            lax.fori_loop(0, Ho, row_body, 0)

            # ---- GroupNorm (two-pass, centered) + affine + SELU, all f32 --------
            y = y_scr[...]                                               # (Ho, nOut, Wo)
            s1 = jnp.sum(jnp.sum(y, axis=2, keepdims=True), axis=0, keepdims=True)
            mean = group_sums(s1.reshape(nOut, 1)).reshape(1, nOut, 1) * inv_cnt
            d = y - mean
            s2 = jnp.sum(jnp.sum(d * d, axis=2, keepdims=True), axis=0, keepdims=True)
            var = group_sums(s2.reshape(nOut, 1)).reshape(1, nOut, 1) * inv_cnt
            z = d * lax.rsqrt(var + GN_EPS) * g_ref[...] + b_ref[...]
            z = SELU_SCALE * jnp.where(z > 0.0, z, SELU_ALPHA * (jnp.exp(z) - 1.0))
            # leading-dim permutation only (lane dim untouched) -> direct NCHW store.
            # Lane-dense whenever Wo % 128 == 0 (true for realistic sizes).
            o_ref[s] = jnp.transpose(z, (1, 0, 2))                       # (nOut, Ho, Wo)

    return kernel


def downsampling_block(x, w, gamma, beta, nIn, nOut):
    """x: (N, nIn, H, W) NCHW float32.  Returns (N, nOut, H//2, W//2) NCHW float32."""
    N, C, H, W = x.shape
    assert C == nIn
    assert H % 2 == 0 and W % 2 == 0, "even spatial dims required (pool + phase split)"
    Ho, Wo = H // 2, W // 2
    HW = Ho * Wo
    use_pool = nIn < nOut
    nConv = nOut - nIn if use_pool else nOut
    G = 32 if nOut >= 32 else nOut
    assert nOut % G == 0, "GroupNorm requires nOut divisible by the group count"
    cpg = nOut // G
    nIn8 = ((nIn + 7) // 8) * 8           # channel pad to a sublane multiple
    K = 9 * nIn8

    # ---- batch folding: amortize per-grid-step overhead at tiny H*W, but keep
    #      grid length >= 2 when possible so both TensorCores get work. ----
    max_bn = max(1, min(8, 4096 // max(HW, 1)))
    bn_cap = max(1, min(max_bn, N // 2 if N >= 2 else 1))
    bn = 1
    for d in range(bn_cap, 0, -1):
        if N % d == 0:
            bn = d
            break

    # ---- wrapper glue (single fused XLA pass ~= 1x padded input in HBM):
    #      channel-pad -> spatial-pad -> stride-2 parity phase split ->
    #      row-slab channel-major layout -> bf16. ----
    xf = x.astype(jnp.float32)
    xcp = jnp.pad(xf, ((0, 0), (0, nIn8 - nIn), (1, 1), (1, 1)))   # (N, nIn8, H+2, W+2)
    ph = jnp.stack([xcp[:, :, a::2, b::2] for a in (0, 1) for b in (0, 1)],
                   axis=1)                                          # (N,4,nIn8,Ho+1,Wo+1)
    ph = jnp.transpose(ph, (0, 1, 3, 2, 4)).astype(jnp.bfloat16)    # (N,4,Ho+1,nIn8,Wo+1)

    # conv weight -> (nConv, (kh,kw,c)-flattened K), padded channels get zero weight
    wp = jnp.pad(w.astype(jnp.float32), ((0, 0), (0, nIn8 - nIn), (0, 0), (0, 0)))
    wflat = jnp.transpose(wp, (0, 2, 3, 1)).reshape(nConv, K).astype(jnp.bfloat16)

    g3 = gamma.reshape(1, nOut, 1).astype(jnp.float32)
    b3 = beta.reshape(1, nOut, 1).astype(jnp.float32)

    kernel = _make_kernel(Ho, Wo, nConv, nIn, nIn8, nOut, cpg, use_pool, bn)

    # ---- VMEM budget: real footprint, clamped to 75% of physical VMEM ----
    def _rup(v, m):
        return ((v + m - 1) // m) * m

    ph_blk = bn * 4 * (Ho + 1) * nIn8 * _rup(Wo + 1, 128) * 2          # bf16
    out_blk = bn * nOut * _rup(Ho, 8) * _rup(Wo, 128) * 4              # f32
    scr_blk = Ho * _rup(nOut, 8) * _rup(Wo, 128) * 4                   # f32
    w_blk = _rup(nConv, 8) * _rup(K, 128) * 2
    est = 2 * ph_blk + 2 * out_blk + 4 * scr_blk + w_blk + (4 << 20)   # + epilogue temps
    try:
        vmem_cap = int(pltpu.get_tpu_info().vmem_capacity_bytes)
    except Exception:
        vmem_cap = 128 * 1024 * 1024
    vmem_limit = int(max(32 * 1024 * 1024, min(int(0.75 * vmem_cap), est)))

    out = pl.pallas_call(
        kernel,
        out_shape=jax.ShapeDtypeStruct((N, nOut, Ho, Wo), jnp.float32),
        grid_spec=pltpu.PrefetchScalarGridSpec(
            num_scalar_prefetch=0,
            grid=(N // bn,),
            in_specs=[
                pl.BlockSpec((bn, 4, Ho + 1, nIn8, Wo + 1),
                             lambda b: (b, 0, 0, 0, 0)),
                pl.BlockSpec((nConv, K), lambda b: (0, 0)),
                pl.BlockSpec((1, nOut, 1), lambda b: (0, 0, 0)),
                pl.BlockSpec((1, nOut, 1), lambda b: (0, 0, 0)),
            ],
            out_specs=pl.BlockSpec((bn, nOut, Ho, Wo), lambda b: (b, 0, 0, 0)),
            scratch_shapes=[pltpu.VMEM((Ho, nOut, Wo), jnp.float32)],
        ),
        compiler_params=pltpu.CompilerParams(
            dimension_semantics=("parallel",),
            vmem_limit_bytes=vmem_limit,
        ),
        cost_estimate=pl.CostEstimate(
            flops=int(2 * N * HW * K * nConv),
            transcendentals=int(N * nOut * HW),
            bytes_accessed=int(ph.size * 2 + wflat.size * 2 + N * nOut * HW * 4),
        ),
    )(ph, wflat, g3, b3)

    return out                                      # already (N, nOut, Ho, Wo) NCHW


def reference(x, w, gamma, beta, nIn, nOut):
    """Pure-JAX f32 reference matching the PyTorch module semantics (NCHW)."""
    use_pool = nIn < nOut
    conv = lax.conv_general_dilated(x, w, window_strides=(2, 2),
                                    padding=((1, 1), (1, 1)),
                                    dimension_numbers=('NCHW', 'OIHW', 'NCHW'))
    if use_pool:
        pool = lax.reduce_window(x, -jnp.inf, lax.max,
                                 (1, 1, 2, 2), (1, 1, 2, 2), 'VALID')
        y = jnp.concatenate([conv, pool], axis=1)
    else:
        y = conv
    G = 32 if nOut >= 32 else nOut
    No, Co, Ho, Wo = y.shape
    yr = y.reshape(No, G, -1)
    mean = yr.mean(axis=2, keepdims=True)
    var = yr.var(axis=2, keepdims=True)
    yn = ((yr - mean) / jnp.sqrt(var + GN_EPS)).reshape(No, Co, Ho, Wo)
    z = yn * gamma[None, :, None, None] + beta[None, :, None, None]
    return SELU_SCALE * jnp.where(z > 0, z, SELU_ALPHA * (jnp.exp(z) - 1.0))


if __name__ == "__main__":
    nIn, nOut = 4, 8                    # nIn < nOut -> concat branch is exercised
    N, H, W = 2, 16, 16
    key = jax.random.PRNGKey(0)
    kx, kw_, kg, kb = jax.random.split(key, 4)

    x = jax.random.normal(kx, (N, nIn, H, W), jnp.float32)
    nConv = nOut - nIn
    w = 0.2 * jax.random.normal(kw_, (nConv, nIn, 3, 3), jnp.float32)   # Conv2d OIHW
    gamma = 1.0 + 0.1 * jax.random.normal(kg, (nOut,), jnp.float32)     # GN weight
    beta = 0.1 * jax.random.normal(kb, (nOut,), jnp.float32)            # GN bias

    out = jax.block_until_ready(downsampling_block(x, w, gamma, beta, nIn, nOut))
    ref = reference(x, w, gamma, beta, nIn, nOut)
    # tolerance reflects bf16 MXU inputs (conv/pool operands); epilogue is f32.
    np.testing.assert_allclose(np.asarray(out), np.asarray(ref), rtol=5e-2, atol=5e-2)
    print("KERNEL_OK")
</pallas_src>

<mosaic_0001>
module attributes {stable_mosaic.version = 11 : i64} {
  func.func @kernel(%arg0: i32, %arg1: memref<1x4x9x8x9xbf16, #tpu.memory_space<vmem>>, %arg2: memref<4x72xbf16, #tpu.memory_space<vmem>>, %arg3: memref<1x8x1xf32, #tpu.memory_space<vmem>>, %arg4: memref<1x8x1xf32, #tpu.memory_space<vmem>>, %arg5: memref<1x8x8x8xf32, #tpu.memory_space<vmem>>, %arg6: memref<8x8x8xf32, #tpu.memory_space<vmem>>) attributes {dimension_semantics = [#tpu.dimension_semantics<parallel>], iteration_bounds = array<i64: 2>, scalar_prefetch = 0 : i64, scratch_operands = 1 : i64, tpu.core_type = #tpu.core_type<tc>, window_params = [{transform_indices = @transform_0, window_bounds = array<i64: 1, 4, 9, 8, 9>}, {pipeline_mode = #tpu.pipeline_mode<synchronous>, transform_indices = @transform_1, window_bounds = array<i64: 4, 72>}, {pipeline_mode = #tpu.pipeline_mode<synchronous>, transform_indices = @transform_2, window_bounds = array<i64: 1, 8, 1>}, {pipeline_mode = #tpu.pipeline_mode<synchronous>, transform_indices = @transform_3, window_bounds = array<i64: 1, 8, 1>}, {transform_indices = @transform_4, window_bounds = array<i64: 1, 8, 8, 8>}]} {
    %c0 = arith.constant 0 : index
    %c0_0 = arith.constant 0 : index
    %0 = vector.load %arg2[%c0, %c0_0] : memref<4x72xbf16, #tpu.memory_space<vmem>>, vector<4x72xbf16>
    %c0_i32 = arith.constant 0 : i32
    %c8_i32 = arith.constant 8 : i32
    %1 = arith.addi %c0_i32, %c8_i32 : i32
    %c1_i32 = arith.constant 1 : i32
    scf.for %arg7 = %c0_i32 to %1 step %c1_i32  : i32 {
      %c0_i32_25 = arith.constant 0 : i32
      %47 = arith.addi %arg7, %c0_i32_25 : i32
      %c0_26 = arith.constant 0 : index
      %c0_27 = arith.constant 0 : index
      %48 = arith.index_cast %47 : i32 to index
      %c0_28 = arith.constant 0 : index
      %c0_29 = arith.constant 0 : index
      %49 = vector.load %arg1[%c0_26, %c0_27, %48, %c0_28, %c0_29] : memref<1x4x9x8x9xbf16, #tpu.memory_space<vmem>>, vector<1x1x1x8x8xbf16>
      %50 = vector.shape_cast %49 : vector<1x1x1x8x8xbf16> to vector<8x8xbf16>
      %c0_i32_30 = arith.constant 0 : i32
      %51 = arith.addi %arg7, %c0_i32_30 : i32
      %c0_31 = arith.constant 0 : index
      %c1 = arith.constant 1 : index
      %52 = arith.index_cast %51 : i32 to index
      %c0_32 = arith.constant 0 : index
      %c0_33 = arith.constant 0 : index
      %53 = vector.load %arg1[%c0_31, %c1, %52, %c0_32, %c0_33] : memref<1x4x9x8x9xbf16, #tpu.memory_space<vmem>>, vector<1x1x1x8x8xbf16>
      %54 = vector.shape_cast %53 : vector<1x1x1x8x8xbf16> to vector<8x8xbf16>
      %c0_i32_34 = arith.constant 0 : i32
      %55 = arith.addi %arg7, %c0_i32_34 : i32
      %c0_35 = arith.constant 0 : index
      %c0_36 = arith.constant 0 : index
      %56 = arith.index_cast %55 : i32 to index
      %c0_37 = arith.constant 0 : index
      %c1_38 = arith.constant 1 : index
      %57 = vector.load %arg1[%c0_35, %c0_36, %56, %c0_37, %c1_38] : memref<1x4x9x8x9xbf16, #tpu.memory_space<vmem>>, vector<1x1x1x8x8xbf16>
      %58 = vector.shape_cast %57 : vector<1x1x1x8x8xbf16> to vector<8x8xbf16>
      %c0_i32_39 = arith.constant 0 : i32
      %59 = arith.addi %arg7, %c0_i32_39 : i32
      %c0_40 = arith.constant 0 : index
      %c2 = arith.constant 2 : index
      %60 = arith.index_cast %59 : i32 to index
      %c0_41 = arith.constant 0 : index
      %c0_42 = arith.constant 0 : index
      %61 = vector.load %arg1[%c0_40, %c2, %60, %c0_41, %c0_42] : memref<1x4x9x8x9xbf16, #tpu.memory_space<vmem>>, vector<1x1x1x8x8xbf16>
      %62 = vector.shape_cast %61 : vector<1x1x1x8x8xbf16> to vector<8x8xbf16>
      %c0_i32_43 = arith.constant 0 : i32
      %63 = arith.addi %arg7, %c0_i32_43 : i32
      %c0_44 = arith.constant 0 : index
      %c3 = arith.constant 3 : index
      %64 = arith.index_cast %63 : i32 to index
      %c0_45 = arith.constant 0 : index
      %c0_46 = arith.constant 0 : index
      %65 = vector.load %arg1[%c0_44, %c3, %64, %c0_45, %c0_46] : memref<1x4x9x8x9xbf16, #tpu.memory_space<vmem>>, vector<1x1x1x8x8xbf16>
      %66 = vector.shape_cast %65 : vector<1x1x1x8x8xbf16> to vector<8x8xbf16>
      %67 = vector.extract_strided_slice %66 {offsets = [0, 0], sizes = [4, 8], strides = [1, 1]} : vector<8x8xbf16> to vector<4x8xbf16>
      %68 = arith.extf %67 : vector<4x8xbf16> to vector<4x8xf32>
      %c0_i32_47 = arith.constant 0 : i32
      %69 = arith.addi %arg7, %c0_i32_47 : i32
      %c0_48 = arith.constant 0 : index
      %c2_49 = arith.constant 2 : index
      %70 = arith.index_cast %69 : i32 to index
      %c0_50 = arith.constant 0 : index
      %c1_51 = arith.constant 1 : index
      %71 = vector.load %arg1[%c0_48, %c2_49, %70, %c0_50, %c1_51] : memref<1x4x9x8x9xbf16, #tpu.memory_space<vmem>>, vector<1x1x1x8x8xbf16>
      %72 = vector.shape_cast %71 : vector<1x1x1x8x8xbf16> to vector<8x8xbf16>
      %73 = vector.extract_strided_slice %72 {offsets = [0, 0], sizes = [4, 8], strides = [1, 1]} : vector<8x8xbf16> to vector<4x8xbf16>
      %74 = arith.extf %73 : vector<4x8xbf16> to vector<4x8xf32>
      %c1_i32_52 = arith.constant 1 : i32
      %75 = arith.addi %arg7, %c1_i32_52 : i32
      %c0_53 = arith.constant 0 : index
      %c0_54 = arith.constant 0 : index
      %76 = arith.index_cast %75 : i32 to index
      %c0_55 = arith.constant 0 : index
      %c0_56 = arith.constant 0 : index
      %77 = vector.load %arg1[%c0_53, %c0_54, %76, %c0_55, %c0_56] : memref<1x4x9x8x9xbf16, #tpu.memory_space<vmem>>, vector<1x1x1x8x8xbf16>
      %78 = vector.shape_cast %77 : vector<1x1x1x8x8xbf16> to vector<8x8xbf16>
      %c1_i32_57 = arith.constant 1 : i32
      %79 = arith.addi %arg7, %c1_i32_57 : i32
      %c0_58 = arith.constant 0 : index
      %c1_59 = arith.constant 1 : index
      %80 = arith.index_cast %79 : i32 to index
      %c0_60 = arith.constant 0 : index
      %c0_61 = arith.constant 0 : index
      %81 = vector.load %arg1[%c0_58, %c1_59, %80, %c0_60, %c0_61] : memref<1x4x9x8x9xbf16, #tpu.memory_space<vmem>>, vector<1x1x1x8x8xbf16>
      %82 = vector.shape_cast %81 : vector<1x1x1x8x8xbf16> to vector<8x8xbf16>
      %83 = vector.extract_strided_slice %82 {offsets = [0, 0], sizes = [4, 8], strides = [1, 1]} : vector<8x8xbf16> to vector<4x8xbf16>
      %84 = arith.extf %83 : vector<4x8xbf16> to vector<4x8xf32>
      %c1_i32_62 = arith.constant 1 : i32
      %85 = arith.addi %arg7, %c1_i32_62 : i32
      %c0_63 = arith.constant 0 : index
      %c0_64 = arith.constant 0 : index
      %86 = arith.index_cast %85 : i32 to index
      %c0_65 = arith.constant 0 : index
      %c1_66 = arith.constant 1 : index
      %87 = vector.load %arg1[%c0_63, %c0_64, %86, %c0_65, %c1_66] : memref<1x4x9x8x9xbf16, #tpu.memory_space<vmem>>, vector<1x1x1x8x8xbf16>
      %88 = vector.shape_cast %87 : vector<1x1x1x8x8xbf16> to vector<8x8xbf16>
      %89 = vector.extract_strided_slice %88 {offsets = [0, 0], sizes = [4, 8], strides = [1, 1]} : vector<8x8xbf16> to vector<4x8xbf16>
      %90 = arith.extf %89 : vector<4x8xbf16> to vector<4x8xf32>
      %91 = tpu.concatenate %50, %54, %58, %62, %66, %72, %78, %82, %88 in 0 : vector<8x8xbf16>, vector<8x8xbf16>, vector<8x8xbf16>, vector<8x8xbf16>, vector<8x8xbf16>, vector<8x8xbf16>, vector<8x8xbf16>, vector<8x8xbf16>, vector<8x8xbf16> -> vector<72x8xbf16>
      %cst_67 = arith.constant dense<0.000000e+00> : vector<4x8xf32>
      %92 = tpu.matmul %0, %91, %cst_67 {dimension_numbers = #tpu.dot_dimension_numbers<[1], [0], [0], [1], [0, 0, 1, 1], [], []>} : vector<4x72xbf16>, vector<72x8xbf16>, vector<4x8xf32> -> vector<4x8xf32>
      %93 = arith.maximumf %68, %74 : vector<4x8xf32>
      %94 = arith.maximumf %93, %84 : vector<4x8xf32>
      %95 = arith.maximumf %94, %90 : vector<4x8xf32>
      %96 = tpu.concatenate %92, %95 in 0 : vector<4x8xf32>, vector<4x8xf32> -> vector<8x8xf32>
      %97 = arith.index_cast %arg7 : i32 to index
      %c0_68 = arith.constant 0 : index
      %c0_69 = arith.constant 0 : index
      %98 = vector.load %arg6[%97, %c0_68, %c0_69] : memref<8x8x8xf32, #tpu.memory_space<vmem>>, vector<1x8x8xf32>
      %99 = vector.shape_cast %98 : vector<1x8x8xf32> to vector<8x8xf32>
      %100 = vector.shape_cast %96 : vector<8x8xf32> to vector<1x8x8xf32>
      tpu.vector_store %arg6[%97, %c0_68, %c0_69], %100 {strides = array<i32>} : memref<8x8x8xf32, #tpu.memory_space<vmem>>, vector<1x8x8xf32>,
    }
    %c8_i32_1 = arith.constant 8 : i32
    %c0_2 = arith.constant 0 : index
    %c0_3 = arith.constant 0 : index
    %c0_4 = arith.constant 0 : index
    %2 = vector.load %arg6[%c0_2, %c0_3, %c0_4] : memref<8x8x8xf32, #tpu.memory_space<vmem>>, vector<8x8x8xf32>
    %cst = arith.constant dense<0.000000e+00> : vector<8x8xf32>
    %3 = vector.multi_reduction <add>, %2, %cst [2] : vector<8x8x8xf32> to vector<8x8xf32>
    %4 = vector.shape_cast %3 : vector<8x8xf32> to vector<8x8x1xf32>
    %cst_5 = arith.constant dense<0.000000e+00> : vector<8x1xf32>
    %5 = vector.multi_reduction <add>, %4, %cst_5 [0] : vector<8x8x1xf32> to vector<8x1xf32>
    %6 = vector.shape_cast %5 : vector<8x1xf32> to vector<1x8x1xf32>
    %7 = vector.shape_cast %6 : vector<1x8x1xf32> to vector<8x1xf32>
    %8 = vector.shape_cast %7 : vector<8x1xf32> to vector<1x8x1xf32>
    %cst_6 = arith.constant 1.562500e-02 : f32
    %9 = vector.broadcast %cst_6 : f32 to vector<1x8x1xf32>
    %10 = arith.mulf %8, %9 : vector<1x8x1xf32>
    %11 = vector.broadcast %10 : vector<1x8x1xf32> to vector<8x8x8xf32>
    %12 = arith.subf %2, %11 : vector<8x8x8xf32>
    %13 = arith.mulf %12, %12 : vector<8x8x8xf32>
    %cst_7 = arith.constant dense<0.000000e+00> : vector<8x8xf32>
    %14 = vector.multi_reduction <add>, %13, %cst_7 [2] : vector<8x8x8xf32> to vector<8x8xf32>
    %15 = vector.shape_cast %14 : vector<8x8xf32> to vector<8x8x1xf32>
    %cst_8 = arith.constant dense<0.000000e+00> : vector<8x1xf32>
    %16 = vector.multi_reduction <add>, %15, %cst_8 [0] : vector<8x8x1xf32> to vector<8x1xf32>
    %17 = vector.shape_cast %16 : vector<8x1xf32> to vector<1x8x1xf32>
    %18 = vector.shape_cast %17 : vector<1x8x1xf32> to vector<8x1xf32>
    %19 = vector.shape_cast %18 : vector<8x1xf32> to vector<1x8x1xf32>
    %cst_9 = arith.constant 1.562500e-02 : f32
    %20 = vector.broadcast %cst_9 : f32 to vector<1x8x1xf32>
    %21 = arith.mulf %19, %20 : vector<1x8x1xf32>
    %cst_10 = arith.constant 9.99999974E-6 : f32
    %22 = vector.broadcast %cst_10 : f32 to vector<1x8x1xf32>
    %23 = arith.addf %21, %22 : vector<1x8x1xf32>
    %24 = math.rsqrt %23 : vector<1x8x1xf32>
    %25 = vector.broadcast %24 : vector<1x8x1xf32> to vector<8x8x8xf32>
    %26 = arith.mulf %12, %25 : vector<8x8x8xf32>
    %c0_11 = arith.constant 0 : index
    %c0_12 = arith.constant 0 : index
    %c0_13 = arith.constant 0 : index
    %27 = vector.load %arg3[%c0_11, %c0_12, %c0_13] : memref<1x8x1xf32, #tpu.memory_space<vmem>>, vector<1x8x1xf32>
    %28 = vector.broadcast %27 : vector<1x8x1xf32> to vector<8x8x8xf32>
    %29 = arith.mulf %26, %28 : vector<8x8x8xf32>
    %c0_14 = arith.constant 0 : index
    %c0_15 = arith.constant 0 : index
    %c0_16 = arith.constant 0 : index
    %30 = vector.load %arg4[%c0_14, %c0_15, %c0_16] : memref<1x8x1xf32, #tpu.memory_space<vmem>>, vector<1x8x1xf32>
    %31 = vector.broadcast %30 : vector<1x8x1xf32> to vector<8x8x8xf32>
    %32 = arith.addf %29, %31 : vector<8x8x8xf32>
    %cst_17 = arith.constant 0.000000e+00 : f32
    %33 = vector.broadcast %cst_17 : f32 to vector<8x8x8xf32>
    %34 = arith.cmpf ogt, %32, %33 : vector<8x8x8xf32>
    %35 = math.exp %32 : vector<8x8x8xf32>
    %cst_18 = arith.constant 1.000000e+00 : f32
    %36 = vector.broadcast %cst_18 : f32 to vector<8x8x8xf32>
    %37 = arith.subf %35, %36 : vector<8x8x8xf32>
    %cst_19 = arith.constant 1.67326319 : f32
    %38 = vector.broadcast %cst_19 : f32 to vector<8x8x8xf32>
    %39 = arith.mulf %38, %37 : vector<8x8x8xf32>
    %40 = arith.select %34, %32, %39 : vector<8x8x8xi1>, vector<8x8x8xf32>
    %cst_20 = arith.constant 1.05070102 : f32
    %41 = vector.broadcast %cst_20 : f32 to vector<8x8x8xf32>
    %42 = arith.mulf %41, %40 : vector<8x8x8xf32>
    %43 = tpu.transpose %42, [1, 0, 2] : vector<8x8x8xf32> -> vector<8x8x8xf32>
    %c0_21 = arith.constant 0 : index
    %c0_22 = arith.constant 0 : index
    %c0_23 = arith.constant 0 : index
    %c0_24 = arith.constant 0 : index
    %44 = vector.load %arg5[%c0_21, %c0_22, %c0_23, %c0_24] : memref<1x8x8x8xf32, #tpu.memory_space<vmem>>, vector<1x8x8x8xf32>
    %45 = vector.shape_cast %44 : vector<1x8x8x8xf32> to vector<8x8x8xf32>
    %46 = vector.shape_cast %43 : vector<8x8x8xf32> to vector<1x8x8x8xf32>
    tpu.vector_store %arg5[%c0_21, %c0_22, %c0_23, %c0_24], %46 {strides = array<i32>} : memref<1x8x8x8xf32, #tpu.memory_space<vmem>>, vector<1x8x8x8xf32>,
    return
  }
  func.func @transform_0(%arg0: i32) -> (i32, i32, i32, i32, i32) {
    %c0_i32 = arith.constant 0 : i32
    %c0_i32_0 = arith.constant 0 : i32
    %c0_i32_1 = arith.constant 0 : i32
    %c0_i32_2 = arith.constant 0 : i32
    %c0_i32_3 = arith.constant 0 : i32
    return %arg0, %c0_i32, %c0_i32_0, %c0_i32_1, %c0_i32_2 : i32, i32, i32, i32, i32
  }
  func.func @transform_1(%arg0: i32) -> (i32, i32) {
    %c0_i32 = arith.constant 0 : i32
    %c0_i32_0 = arith.constant 0 : i32
    %c0_i32_1 = arith.constant 0 : i32
    return %c0_i32, %c0_i32_0 : i32, i32
  }
  func.func @transform_2(%arg0: i32) -> (i32, i32, i32) {
    %c0_i32 = arith.constant 0 : i32
    %c0_i32_0 = arith.constant 0 : i32
    %c0_i32_1 = arith.constant 0 : i32
    %c0_i32_2 = arith.constant 0 : i32
    return %c0_i32, %c0_i32_0, %c0_i32_1 : i32, i32, i32
  }
  func.func @transform_3(%arg0: i32) -> (i32, i32, i32) {
    %c0_i32 = arith.constant 0 : i32
    %c0_i32_0 = arith.constant 0 : i32
    %c0_i32_1 = arith.constant 0 : i32
    %c0_i32_2 = arith.constant 0 : i32
    return %c0_i32, %c0_i32_0, %c0_i32_1 : i32, i32, i32
  }
  func.func @transform_4(%arg0: i32) -> (i32, i32, i32, i32) {
    %c0_i32 = arith.constant 0 : i32
    %c0_i32_0 = arith.constant 0 : i32
    %c0_i32_1 = arith.constant 0 : i32
    %c0_i32_2 = arith.constant 0 : i32
    return %arg0, %c0_i32, %c0_i32_0, %c0_i32_1 : i32, i32, i32, i32
  }
}

</mosaic_0001>

<llo_original>
// kernel: tpu_custom_call.1
$region0: #{tpu_custom_call.1}
  #allocation0 [shape = 'u32[]', space=smem, size = 0x4, offset = 0x4, fixed_abs, tag = 'smem constant byte address 0x4 - core index']
  #allocation1 [shape = 'u32[144,128]{1,0:T(1,128)}', space=vmem, size = 0x12000, scoped, tag = 'internal scratch']
  #allocation2 [shape = 'f32[8,8,8]{2,1,0:T(8,128)}', space=vmem, size = 0x8000, scoped, tag = 'scratch operand']
  %s0 = inlined_call_operand.hbm [shape: bf16[2,4,9,8,9], index: 0, kind: input, shape index: {}]
  %s1 = inlined_call_operand.vmem [shape: bf16[4,72], index: 1, kind: input, shape index: {}]
  %s2 = inlined_call_operand.vmem [shape: f32[1,8,1], index: 2, kind: input, shape index: {}]
  %s3 = inlined_call_operand.vmem [shape: f32[1,8,1], index: 3, kind: input, shape index: {}]
  %s4 = inlined_call_operand.hbm [shape: f32[2,8,8,8], index: 4, kind: output, shape index: {}]
  %s5 = sld [smem:[#allocation0]]
  $region60: #{tpu_custom_call.1} parent=0
    _
  %s7 = ssub.s32 1, %s5
  %s8 = scalar_select 0, %s7, %s5
  $region1: #{tpu_custom_call.1} parent=0
    #allocation3 [shape = 'u8[147456]{0}', space=vmem, size = 0x24000, scoped, tag = 'input window, operand 0']
    #allocation4 [shape = 's32[2]{0}', space=sflag, size = 0x8, scoped, tag = 'scoped memory for tpu_custom_call.1']
    #allocation5 [shape = 's32[2]{0}', space=sflag, size = 0x8, scoped, tag = 'scoped memory for tpu_custom_call.1']
    #allocation6 [shape = 'u8[65536]{0}', space=vmem, size = 0x10000, scoped, tag = 'output window, operand 0']
    %9 = vsyncpa [#allocation4], 0
    %s10 = scalar_lea.sflag [#allocation4], 1
    %11 = vsyncpa %s10, 0
    %12 = vsyncpa [#allocation5], 0
    %s13 = scalar_lea.sflag [#allocation5], 1
    %14 = vsyncpa %s13, 0
    loop: start=0, step=1, limit=4
    $region2: #{tpu_custom_call.1} parent=1 // loop_pre_header
      _
    $region3: #{tpu_custom_call.1} parent=1 // loop_header
      %s16 = sphi 0, %s20
      %p17 = scmp.ge.s32.totalorder %s16, 4
      %s26 = sphi 0, %s28
      %s29 = sphi 0, %s26
      %s30 = sphi 0, %s29
      %s46 = sphi 0, %s30
      %s50 = sphi 0, %s50
      %s52 = sphi 0, %s50
      %s53 = sphi 0, %s52
      %s67 = sphi 0, %s53
      %s71 = sphi 0, %s71
      %s73 = sphi 0, %s71
      %s74 = sphi 0, %s73
      %s88 = sphi 0, %s74
      %s92 = sphi 0, %s92
      %s94 = sphi 0, %s92
      %s95 = sphi 0, %s94
      %s109 = sphi 0, %s95
      %s115 = sphi 0, %s117
      %s118 = sphi 0, %s115
      %s119 = sphi 0, %s118
      %s135 = sphi 0, %s119
    $region4: #{tpu_custom_call.1} parent=1 // loop_header_branch
      %19 = sbr.rel (%p17) target = $region8
    $region5: #{tpu_custom_call.1} parent=1 // loop_body
      %s21 = ssub.s32 %s16, 1
      %s22 = ssub.s32 %s16, 2
      %s23 = sadd.s32 %s16, 1
      %s24 = ssub.s32 %s16, %s23
      %p25 = scmp.eq.s32.totalorder %s24, 0
      %s27 = sadd.s32 %s26, 1
      %s28 = scalar_select %p25, %s26, %s27
      %p31 = pneg %p25
      %p32 = scmp.eq.s32.totalorder %s16, 1
      %p33 = por %p31, %p32
      %p34 = scmp.ne.s32.totalorder %s26, %s29
      %p35 = scmp.eq.s32.totalorder %s16, 0
      %p36 = por %p34, %p35
      %p37 = scmp.ne.s32.totalorder %s26, %s29
      %p38 = scmp.eq.s32.totalorder %s21, 1
      %p39 = por %p37, %p38
      %p40 = scmp.ne.s32.totalorder %s29, %s30
      %p41 = scmp.eq.s32.totalorder %s21, 0
      %p42 = por %p40, %p41
      %p43 = scmp.ne.s32.totalorder %s29, %s30
      %p44 = scmp.eq.s32.totalorder %s22, 1
      %p45 = por %p43, %p44
      %p47 = scmp.ne.s32.totalorder %s30, %s46
      %p48 = scmp.eq.s32.totalorder %s22, 0
      %p49 = por %p47, %p48
      %s51 = sadd.s32 %s50, 1
      %p54 = scmp.eq.s32.totalorder %s16, 1
      %p55 = scmp.ne.s32.totalorder %s50, %s52
      %p56 = scmp.eq.s32.totalorder %s16, 0
      %p57 = por %p55, %p56
      %p58 = scmp.ne.s32.totalorder %s50, %s52
      %p59 = scmp.eq.s32.totalorder %s21, 1
      %p60 = por %p58, %p59
      %p61 = scmp.ne.s32.totalorder %s52, %s53
      %p62 = scmp.eq.s32.totalorder %s21, 0
      %p63 = por %p61, %p62
      %p64 = scmp.ne.s32.totalorder %s52, %s53
      %p65 = scmp.eq.s32.totalorder %s22, 1
      %p66 = por %p64, %p65
      %p68 = scmp.ne.s32.totalorder %s53, %s67
      %p69 = scmp.eq.s32.totalorder %s22, 0
      %p70 = por %p68, %p69
      %s72 = sadd.s32 %s71, 1
      %p75 = scmp.eq.s32.totalorder %s16, 1
      %p76 = scmp.ne.s32.totalorder %s71, %s73
      %p77 = scmp.eq.s32.totalorder %s16, 0
      %p78 = por %p76, %p77
      %p79 = scmp.ne.s32.totalorder %s71, %s73
      %p80 = scmp.eq.s32.totalorder %s21, 1
      %p81 = por %p79, %p80
      %p82 = scmp.ne.s32.totalorder %s73, %s74
      %p83 = scmp.eq.s32.totalorder %s21, 0
      %p84 = por %p82, %p83
      %p85 = scmp.ne.s32.totalorder %s73, %s74
      %p86 = scmp.eq.s32.totalorder %s22, 1
      %p87 = por %p85, %p86
      %p89 = scmp.ne.s32.totalorder %s74, %s88
      %p90 = scmp.eq.s32.totalorder %s22, 0
      %p91 = por %p89, %p90
      %s93 = sadd.s32 %s92, 1
      %p96 = scmp.eq.s32.totalorder %s16, 1
      %p97 = scmp.ne.s32.totalorder %s92, %s94
      %p98 = scmp.eq.s32.totalorder %s16, 0
      %p99 = por %p97, %p98
      %p100 = scmp.ne.s32.totalorder %s92, %s94
      %p101 = scmp.eq.s32.totalorder %s21, 1
      %p102 = por %p100, %p101
      %p103 = scmp.ne.s32.totalorder %s94, %s95
      %p104 = scmp.eq.s32.totalorder %s21, 0
      %p105 = por %p103, %p104
      %p106 = scmp.ne.s32.totalorder %s94, %s95
      %p107 = scmp.eq.s32.totalorder %s22, 1
      %p108 = por %p106, %p107
      %p110 = scmp.ne.s32.totalorder %s95, %s109
      %p111 = scmp.eq.s32.totalorder %s22, 0
      %p112 = por %p110, %p111
      %s113 = ssub.s32 %s16, %s23
      %p114 = scmp.eq.s32.totalorder %s113, 0
      %s116 = sadd.s32 %s115, 1
      %s117 = scalar_select %p114, %s115, %s116
      %p120 = pneg %p114
      %p121 = scmp.eq.s32.totalorder %s16, 1
      %p122 = por %p120, %p121
      %p123 = scmp.ne.s32.totalorder %s115, %s118
      %p124 = scmp.eq.s32.totalorder %s16, 0
      %p125 = por %p123, %p124
      %p126 = scmp.ne.s32.totalorder %s115, %s118
      %p127 = scmp.eq.s32.totalorder %s21, 1
      %p128 = por %p126, %p127
      %p129 = scmp.ne.s32.totalorder %s118, %s119
      %p130 = scmp.eq.s32.totalorder %s21, 0
      %p131 = por %p129, %p130
      %p132 = scmp.ne.s32.totalorder %s118, %s119
      %p133 = scmp.eq.s32.totalorder %s22, 1
      %p134 = por %p132, %p133
      %p136 = scmp.ne.s32.totalorder %s119, %s135
      %p137 = scmp.eq.s32.totalorder %s22, 0
      %p138 = por %p136, %p137
      %p139 = scmp.le.s32.totalorder 1, %s16
      %p140 = scmp.lt.s32.totalorder %s16, 3
      %p141 = pnand %p139, %p140
      %p142 = pneg %p141
      // Predicated region
      $region9: #{tpu_custom_call.1} parent=5 // pred_check
        _
      $region10: #{tpu_custom_call.1} parent=5 // pred_check_branch
        %144 = sbr.rel (%p141) target = $region12
      $region11: #{tpu_custom_call.1} parent=5 // pred_region
        %s145 = ssub.s32 %s16, 1
        // Predicated region
        $region13: #{tpu_custom_call.1} parent=11 // pred_check
          %p146 = pneg %p63
        $region14: #{tpu_custom_call.1} parent=11 // pred_check_branch
          %148 = sbr.rel (%p146) target = $region16
        $region15: #{tpu_custom_call.1} parent=11 // pred_region
          _
        $region16: #{tpu_custom_call.1} parent=11 // pred_fallthru
          _
        // Predicated region
        $region17: #{tpu_custom_call.1} parent=11 // pred_check
          %p149 = pneg %p84
        $region18: #{tpu_custom_call.1} parent=11 // pred_check_branch
          %151 = sbr.rel (%p149) target = $region20
        $region19: #{tpu_custom_call.1} parent=11 // pred_region
          _
        $region20: #{tpu_custom_call.1} parent=11 // pred_fallthru
          _
        // Predicated region
        $region21: #{tpu_custom_call.1} parent=11 // pred_check
          %p152 = pneg %p105
        $region22: #{tpu_custom_call.1} parent=11 // pred_check_branch
          %154 = sbr.rel (%p152) target = $region24
        $region23: #{tpu_custom_call.1} parent=11 // pred_region
          _
        $region24: #{tpu_custom_call.1} parent=11 // pred_fallthru
          _
      $region12: #{tpu_custom_call.1} parent=5 // pred_fallthru
        _
      %p155 = scmp.lt.s32.totalorder %s16, 2
      // Predicated region
      $region25: #{tpu_custom_call.1} parent=5 // pred_check
        %p156 = pneg %p155
      $region26: #{tpu_custom_call.1} parent=5 // pred_check_branch
        %158 = sbr.rel (%p156) target = $region28
      $region27: #{tpu_custom_call.1} parent=5 // pred_region
        // Predicated region
        $region29: #{tpu_custom_call.1} parent=27 // pred_check
          %p159 = pneg %p36
        $region30: #{tpu_custom_call.1} parent=27 // pred_check_branch
          %161 = sbr.rel (%p159) target = $region32
        $region31: #{tpu_custom_call.1} parent=27 // pred_region
          %s162 = sand.u32 %s26, 1
          %s163 = scalar_lea.sflag [#allocation4], %s162
          %s164 = sand.u32 %s26, 1
          %s165 = smul.addr %s164, 144
          %s166 = scalar_lea.vmem [#allocation3], %s165
          %s168 = ssub.s32 2304, 2304
          %169 = vsyncadd %s163, %s168
          %s170 = smul.addr %s16, 36
          %s171 = smul.addr %s170, 64
          %s172 = scalar_lea.hbm %s0, %s171
          %s173 = sshll.u32 %s166, 4
          %s174 = int_to_ptr.vmem [resolvable:$true] %s173
          %179 = dma.hbm_to_vmem [thread:$0]  %s172, 2304, %s174, %s163, 64, 64, 4
        $region32: #{tpu_custom_call.1} parent=27 // pred_fallthru
          _
      $region28: #{tpu_custom_call.1} parent=5 // pred_fallthru
        _
      %p180 = scmp.le.s32.totalorder 1, %s16
      %p181 = scmp.lt.s32.totalorder %s16, 3
      %p182 = pnand %p180, %p181
      %p183 = pneg %p182
      // Predicated region
      $region33: #{tpu_custom_call.1} parent=5 // pred_check
        _
      $region34: #{tpu_custom_call.1} parent=5 // pred_check_branch
        %185 = sbr.rel (%p182) target = $region36
      $region35: #{tpu_custom_call.1} parent=5 // pred_region
        %s186 = ssub.s32 %s16, 1
        %s187 = sand.u32 %s29, 1
        %s188 = scalar_lea.sflag [#allocation4], %s187
        %s189 = sand.u32 %s29, 1
        %s190 = smul.addr %s189, 144
        %s191 = scalar_lea.vmem [#allocation3], %s190
        // Predicated region
        $region37: #{tpu_custom_call.1} parent=35 // pred_check
          %p192 = pneg %p42
        $region38: #{tpu_custom_call.1} parent=35 // pred_check_branch
          %194 = sbr.rel (%p192) target = $region40
        $region39: #{tpu_custom_call.1} parent=35 // pred_region
          %195 = dma.done %s188, 2304
        $region40: #{tpu_custom_call.1} parent=35 // pred_fallthru
          _
        %s196 = sand.u32 %s29, 1
        %s197 = scalar_lea.sflag [#allocation4], %s196
        %s198 = sand.u32 %s29, 1
        %s199 = smul.addr %s198, 144
        %s200 = scalar_lea.vmem [#allocation3], %s199
        %p201 = pneg %p42
        %p202 = pneg %p39
        %p203 = pneg %p63
        %p204 = pneg %p60
        %p205 = pneg %p84
        %p206 = pneg %p81
        %p207 = pneg %p105
        %p208 = pneg %p102
        %p209 = pneg %p131
        %p210 = pneg %p128
        %s211 = sand.u32 %s118, 1
        %s212 = scalar_lea.sflag [#allocation5], %s211
        %s213 = sand.u32 %s118, 1
        %s214 = smul.addr %s213, 64
        %s215 = scalar_lea.vmem [#allocation6], %s214
        %v217 = vld [vmem:[%s1] sm:$0x3]
        loop: start=0, step=1, limit=8
        $region41: #{tpu_custom_call.1} parent=35 // loop_pre_header
          _
        $region42: #{tpu_custom_call.1} parent=35 // loop_header
          %s219 = sphi 0, %s223
          %p220 = scmp.ge.s32.totalorder %s219, 8
        $region43: #{tpu_custom_call.1} parent=35 // loop_header_branch
          %222 = sbr.rel (%p220) target = $region47
        $region44: #{tpu_custom_call.1} parent=35 // loop_body
          %s224 = smul.addr %s219, 4
          %s225 = scalar_lea.vmem %s191, %s224 [#allocation3]
          %v226 = vld [vmem:[%s225] sm:$0xf]
          %s227 = sadd.s32 %s219, 9
          %s228 = smul.addr %s227, 4
          %s229 = scalar_lea.vmem %s191, %s228 [#allocation3]
          %v230 = vld [vmem:[%s229] sm:$0xf]
          %s231 = sadd.s32 %s219, 18
          %s232 = smul.addr %s231, 4
          %s233 = scalar_lea.vmem %s191, %s232 [#allocation3]
          %v234 = vld [vmem:[%s233] sm:$0xf]
          %s235 = sadd.s32 %s219, 27
          %s236 = smul.addr %s235, 4
          %s237 = scalar_lea.vmem %s191, %s236 [#allocation3]
          %v238 = vld [vmem:[%s237] sm:$0xf]
          %v239 = vunpack.c.l.bf16 %v238
          %v240 = vunpack.c.l.bf16 %v234
          %s241 = sadd.s32 %s219, 1
          %s242 = smul.addr %s241, 4
          %s243 = scalar_lea.vmem %s191, %s242 [#allocation3]
          %v244 = vld [vmem:[%s243] sm:$0xf]
          %s245 = sadd.s32 %s241, 9
          %s246 = smul.addr %s245, 4
          %s247 = scalar_lea.vmem %s191, %s246 [#allocation3]
          %v248 = vld [vmem:[%s247] sm:$0xf]
          %v249 = vunpack.c.l.bf16 %v248
          %v250 = vunpack.c.l.bf16 %v244
          %v252 = vunpack.c.l.b16 %v230
          %v253 = vpack.c.b16 %v252, %v252
          %v255 = vunpack.c.l.b16 %v226
          %v256 = vpack.c.b16 %v255, %v255
          %257 = vrot.lane.b32.xlu0 %v256, 127
          %v258 = vpop.permute.xlu0 %257
          %v260 = vunpack.c.l.b16 %v234
          %v261 = vpack.c.b16 %v260, %v260
          %262 = vrot.lane.b32.xlu0 %v261, 127
          %v263 = vpop.permute.xlu0 %262
          %v265 = vunpack.c.l.b16 %v248
          %v266 = vpack.c.b16 %v265, %v265
          %v268 = vunpack.c.l.b16 %v244
          %v269 = vpack.c.b16 %v268, %v268
          %270 = vrot.lane.b32.xlu0 %v269, 127
          %v271 = vpop.permute.xlu0 %270
          %vm272 = vcmask 1043456
          %v275 = vsel %vm272, %v226, %v253
          %v279 = vsel %vm272, %v258, %v261
          %v283 = vsel %vm272, %v238, %v263
          %v287 = vsel %vm272, %v244, %v266
          %vm289 = vcmask 588800
          %v291 = vsel %vm289, %v217, 0
          %v294 = vsel %vm272, %v271, 0
          %296 = vmatprep.subr.bf16.mxu0 0
          %297 = vmatpush1.bf16.msra.mxu0 %v275
          %298 = vmatprep.subr.bf16.mxu0 0
          %299 = vmatpush1.bf16.msra.mxu0 %v279
          %300 = vmatprep.subr.bf16.mxu0 0
          %301 = vmatpush1.bf16.msra.mxu0 %v283
          %302 = vmatprep.subr.bf16.mxu0 0
          %303 = vmatpush1.bf16.msra.mxu0 %v287
          %304 = vmatprep.subr.bf16.mxu0 0
          %305 = vmatpush1.bf16.msra.mxu0 %v294
          %306 = vmatprep.subr.bf16.mxu0 0
          %307 = vmatpush1.bf16.msra.mxu0 0
          %308 = vmatprep.subr.bf16.mxu0 0
          %309 = vmatpush1.bf16.msra.mxu0 0
          %310 = vmatprep.subr.bf16.mxu0 0
          %311 = vmatpush1.bf16.msra.mxu0 0
          %312 = vmatprep.subr.bf16.mxu0 0
          %313 = vmatpush1.bf16.msra.mxu0 0
          %314 = vmatprep.subr.bf16.mxu0 0
          %315 = vmatpush1.bf16.msra.mxu0 0
          %316 = vmatprep.subr.bf16.mxu0 0
          %317 = vmatpush1.bf16.msra.mxu0 0
          %318 = vmatprep.subr.bf16.mxu0 0
          %319 = vmatpush1.bf16.msra.mxu0 0
          %320 = vmatprep.subr.bf16.mxu0 0
          %321 = vmatpush1.bf16.msra.mxu0 0
          %322 = vmatprep.subr.bf16.mxu0 0
          %323 = vmatpush1.bf16.msra.mxu0 0
          %324 = vmatprep.subr.bf16.mxu0 0
          %325 = vmatpush1.bf16.msra.mxu0 0
          %326 = vmatprep.subr.bf16.mxu0 0
          %327 = vmatpush1.bf16.msra.mxu0 0
          %328 = vmatprep.mubr.bf16.mxu0 0
          %329 = vmatmul.mubr.bf16.gmra.mrb[0].mxu0 %v291
          %v330 = vpop.f32.mrb[0].mxu0
          %v331 = vadd.f32 0.0, %v330
          %v332 = vpop.f32.mrb[0].mxu0
          %v333 = vpop.f32.mrb[0].mxu0
          %v334 = vpop.f32.mrb[0].mxu0
          %335 = vdwg.mxu0
          %337 = vrot.lane.b32.xlu0 %v240, 127
          %v338 = vpop.permute.xlu0 %337
          %v340 = vmax.f32 %v239, %v338
          %v341 = vmax.f32 %v340, %v249
          %343 = vrot.lane.b32.xlu0 %v250, 127
          %v344 = vpop.permute.xlu0 %343
          %v346 = vmax.f32 %v341, %v344
          %v348 = vrot.slane %v346, 4
          %v350 = vsel %vm272, %v331, %v348
          %s351 = smul.u32 %s219, 8
          %s352 = scalar_lea.vmem [#allocation2], %s351
          %vm353 = vcmask 64512
          %354 = vst.msk [vmem:[%s352] sm:$0xff] %vm353, %v350
        $region45: #{tpu_custom_call.1} parent=35 // loop_footer
          %s223 = sadd.s32 1, %s219
        $region46: #{tpu_custom_call.1} parent=35 // loop_footer_branch
          %218 = sbr.rel target = $region42
        $region47: #{tpu_custom_call.1} parent=35 // loop_exit
          _
        %v355 = vld [vmem:[#allocation2] sm:$0xff]
        %v356 = vld [vmem:[#allocation2 + $0x8] sm:$0xff]
        %v357 = vld [vmem:[#allocation2 + $0x10] sm:$0xff]
        %v358 = vld [vmem:[#allocation2 + $0x18] sm:$0xff]
        %v359 = vld [vmem:[#allocation2 + $0x20] sm:$0xff]
        %v360 = vld [vmem:[#allocation2 + $0x28] sm:$0xff]
        %v361 = vld [vmem:[#allocation2 + $0x30] sm:$0xff]
        %v362 = vld [vmem:[#allocation2 + $0x38] sm:$0xff]
        %vm363 = vcmask 64512
        %v364 = vsel %vm363, %v355, 0.0
        %365 = vadd.xlane.f32.xlu0 %v364
        %v366 = vpop.xlane.xlu0 %365
        %v367 = vsel %vm363, %v356, 0.0
        %368 = vadd.xlane.f32.xlu0 %v367
        %v369 = vpop.xlane.xlu0 %368
        %v370 = vsel %vm363, %v357, 0.0
        %371 = vadd.xlane.f32.xlu0 %v370
        %v372 = vpop.xlane.xlu0 %371
        %v373 = vsel %vm363, %v358, 0.0
        %374 = vadd.xlane.f32.xlu0 %v373
        %v375 = vpop.xlane.xlu0 %374
        %v376 = vsel %vm363, %v359, 0.0
        %377 = vadd.xlane.f32.xlu0 %v376
        %v378 = vpop.xlane.xlu0 %377
        %v379 = vsel %vm363, %v360, 0.0
        %380 = vadd.xlane.f32.xlu0 %v379
        %v381 = vpop.xlane.xlu0 %380
        %v382 = vsel %vm363, %v361, 0.0
        %383 = vadd.xlane.f32.xlu0 %v382
        %v384 = vpop.xlane.xlu0 %383
        %v385 = vsel %vm363, %v362, 0.0
        %386 = vadd.xlane.f32.xlu0 %v385
        %v387 = vpop.xlane.xlu0 %386
        %v388 = vadd.f32 %v366, %v369
        %v389 = vadd.f32 %v388, %v372
        %v390 = vadd.f32 %v389, %v375
        %v391 = vadd.f32 %v390, %v378
        %v392 = vadd.f32 %v391, %v381
        %v393 = vadd.f32 %v392, %v384
        %v394 = vadd.f32 %v393, %v387
        %v395 = vmul.f32 %v394, 0.015625
        %v396 = vsub.f32 %v355, %v395
        %v397 = vsub.f32 %v356, %v395
        %v398 = vsub.f32 %v357, %v395
        %v399 = vsub.f32 %v358, %v395
        %v400 = vsub.f32 %v359, %v395
        %v401 = vsub.f32 %v360, %v395
        %v402 = vsub.f32 %v361, %v395
        %v403 = vsub.f32 %v362, %v395
        %v404 = vmul.f32 %v396, %v396
        %v405 = vmul.f32 %v397, %v397
        %v406 = vmul.f32 %v398, %v398
        %v407 = vmul.f32 %v399, %v399
        %v408 = vmul.f32 %v400, %v400
        %v409 = vmul.f32 %v401, %v401
        %v410 = vmul.f32 %v402, %v402
        %v411 = vmul.f32 %v403, %v403
        %v412 = vsel %vm363, %v404, 0.0
        %413 = vadd.xlane.f32.xlu0 %v412
        %v414 = vpop.xlane.xlu0 %413
        %v415 = vsel %vm363, %v405, 0.0
        %416 = vadd.xlane.f32.xlu0 %v415
        %v417 = vpop.xlane.xlu0 %416
        %v418 = vsel %vm363, %v406, 0.0
        %419 = vadd.xlane.f32.xlu0 %v418
        %v420 = vpop.xlane.xlu0 %419
        %v421 = vsel %vm363, %v407, 0.0
        %422 = vadd.xlane.f32.xlu0 %v421
        %v423 = vpop.xlane.xlu0 %422
        %v424 = vsel %vm363, %v408, 0.0
        %425 = vadd.xlane.f32.xlu0 %v424
        %v426 = vpop.xlane.xlu0 %425
        %v427 = vsel %vm363, %v409, 0.0
        %428 = vadd.xlane.f32.xlu0 %v427
        %v429 = vpop.xlane.xlu0 %428
        %v430 = vsel %vm363, %v410, 0.0
        %431 = vadd.xlane.f32.xlu0 %v430
        %v432 = vpop.xlane.xlu0 %431
        %v433 = vsel %vm363, %v411, 0.0
        %434 = vadd.xlane.f32.xlu0 %v433
        %v435 = vpop.xlane.xlu0 %434
        %v436 = vadd.f32 %v414, %v417
        %v437 = vadd.f32 %v436, %v420
        %v438 = vadd.f32 %v437, %v423
        %v439 = vadd.f32 %v438, %v426
        %v440 = vadd.f32 %v439, %v429
        %v441 = vadd.f32 %v440, %v432
        %v442 = vadd.f32 %v441, %v435
        %v443 = vmul.f32 %v442, 0.015625
        %v444 = vadd.f32 %v443, 1e-05
        %v445 = vrsqrt.pop %v444
        %v446 = vmul.f32 %v396, %v445
        %v447 = vmul.f32 %v397, %v445
        %v448 = vmul.f32 %v398, %v445
        %v449 = vmul.f32 %v399, %v445
        %v450 = vmul.f32 %v400, %v445
        %v451 = vmul.f32 %v401, %v445
        %v452 = vmul.f32 %v402, %v445
        %v453 = vmul.f32 %v403, %v445
        %v454 = vld [vmem:[%s2] sm:$0xff]
        %456 = vset.pattern.permute.xlu0 0
        %457 = vperm.xlu0 %456, %v454
        %v458 = vpop.permute.xlu0 %457
        %v460 = vmul.f32 %v446, %v458
        %v461 = vmul.f32 %v447, %v458
        %v462 = vmul.f32 %v448, %v458
        %v463 = vmul.f32 %v449, %v458
        %v464 = vmul.f32 %v450, %v458
        %v465 = vmul.f32 %v451, %v458
        %v466 = vmul.f32 %v452, %v458
        %v467 = vmul.f32 %v453, %v458
        %v468 = vld [vmem:[%s3] sm:$0xff]
        %470 = vset.pattern.permute.xlu0 0
        %471 = vperm.xlu0 %470, %v468
        %v472 = vpop.permute.xlu0 %471
        %v474 = vadd.f32 %v460, %v472
        %v475 = vadd.f32 %v461, %v472
        %v476 = vadd.f32 %v462, %v472
        %v477 = vadd.f32 %v463, %v472
        %v478 = vadd.f32 %v464, %v472
        %v479 = vadd.f32 %v465, %v472
        %v480 = vadd.f32 %v466, %v472
        %v481 = vadd.f32 %v467, %v472
        %vm482 = vcmp.gt.f32.partialorder %v474, 0.0
        %vm483 = vcmp.gt.f32.partialorder %v475, 0.0
        %vm484 = vcmp.gt.f32.partialorder %v476, 0.0
        %vm485 = vcmp.gt.f32.partialorder %v477, 0.0
        %vm486 = vcmp.gt.f32.partialorder %v478, 0.0
        %vm487 = vcmp.gt.f32.partialorder %v479, 0.0
        %vm488 = vcmp.gt.f32.partialorder %v480, 0.0
        %vm489 = vcmp.gt.f32.partialorder %v481, 0.0
        %v490 = vmul.f32 %v474, 1.442695
        %v491 = vpow.pop %v490
        %v492 = vmul.f32 %v475, 1.442695
        %v493 = vpow.pop %v492
        %v494 = vmul.f32 %v476, 1.442695
        %v495 = vpow.pop %v494
        %v496 = vmul.f32 %v477, 1.442695
        %v497 = vpow.pop %v496
        %v498 = vmul.f32 %v478, 1.442695
        %v499 = vpow.pop %v498
        %v500 = vmul.f32 %v479, 1.442695
        %v501 = vpow.pop %v500
        %v502 = vmul.f32 %v480, 1.442695
        %v503 = vpow.pop %v502
        %v504 = vmul.f32 %v481, 1.442695
        %v505 = vpow.pop %v504
        %v506 = vsub.f32 %v491, 1.0
        %v507 = vsub.f32 %v493, 1.0
        %v508 = vsub.f32 %v495, 1.0
        %v509 = vsub.f32 %v497, 1.0
        %v510 = vsub.f32 %v499, 1.0
        %v511 = vsub.f32 %v501, 1.0
        %v512 = vsub.f32 %v503, 1.0
        %v513 = vsub.f32 %v505, 1.0
        %v514 = vmul.f32 %v506, 1.6732632
        %v515 = vmul.f32 %v507, 1.6732632
        %v516 = vmul.f32 %v508, 1.6732632
        %v517 = vmul.f32 %v509, 1.6732632
        %v518 = vmul.f32 %v510, 1.6732632
        %v519 = vmul.f32 %v511, 1.6732632
        %v520 = vmul.f32 %v512, 1.6732632
        %v521 = vmul.f32 %v513, 1.6732632
        %v522 = vsel %vm482, %v474, %v514
        %v523 = vsel %vm483, %v475, %v515
        %v524 = vsel %vm484, %v476, %v516
        %v525 = vsel %vm485, %v477, %v517
        %v526 = vsel %vm486, %v478, %v518
        %v527 = vsel %vm487, %v479, %v519
        %v528 = vsel %vm488, %v480, %v520
        %v529 = vsel %vm489, %v481, %v521
        %v530 = vmul.f32 %v522, 1.050701
        %v531 = vmul.f32 %v523, 1.050701
        %v532 = vmul.f32 %v524, 1.050701
        %v533 = vmul.f32 %v525, 1.050701
        %v534 = vmul.f32 %v526, 1.050701
        %v535 = vmul.f32 %v527, 1.050701
        %v536 = vmul.f32 %v528, 1.050701
        %v537 = vmul.f32 %v529, 1.050701
        %v538 = vcombine.low %v530, %v532
        %v539 = vcombine.high %v530, %v532
        %v541 = vunpack.c.l.s4 1983009808
        %v542 = vunpack.c.0.s8 %v541
        %v543 = vlaneseq
        %v544 = vshrl.u32 %v543, 7
        %v545 = vsub.s32 %v542, %v544
        %v546 = vrot.slane %v538, %v545
        %v548 = vunpack.c.l.s4 1983009808
        %v549 = vunpack.c.0.s8 %v548
        %v550 = vlaneseq
        %v551 = vshrl.u32 %v550, 7
        %v552 = vsub.s32 %v549, %v551
        %v553 = vrot.slane %v539, %v552
        %v554 = vcombine.low %v531, %v533
        %v555 = vcombine.high %v531, %v533
        %v557 = vunpack.c.l.s4 1983009808
        %v558 = vunpack.c.0.s8 %v557
        %v559 = vlaneseq
        %v560 = vshrl.u32 %v559, 7
        %v561 = vsub.s32 %v558, %v560
        %v562 = vrot.slane %v554, %v561
        %v564 = vunpack.c.l.s4 1983009808
        %v565 = vunpack.c.0.s8 %v564
        %v566 = vlaneseq
        %v567 = vshrl.u32 %v566, 7
        %v568 = vsub.s32 %v565, %v567
        %v569 = vrot.slane %v555, %v568
        %v570 = vcombine.low %v534, %v536
        %v571 = vcombine.high %v534, %v536
        %v573 = vunpack.c.l.s4 1983009808
        %v574 = vunpack.c.0.s8 %v573
        %v575 = vlaneseq
        %v576 = vshrl.u32 %v575, 7
        %v577 = vsub.s32 %v574, %v576
        %v578 = vrot.slane %v570, %v577
        %v580 = vunpack.c.l.s4 1983009808
        %v581 = vunpack.c.0.s8 %v580
        %v582 = vlaneseq
        %v583 = vshrl.u32 %v582, 7
        %v584 = vsub.s32 %v581, %v583
        %v585 = vrot.slane %v571, %v584
        %v586 = vcombine.low %v535, %v537
        %v587 = vcombine.high %v535, %v537
        %v589 = vunpack.c.l.s4 1983009808
        %v590 = vunpack.c.0.s8 %v589
        %v591 = vlaneseq
        %v592 = vshrl.u32 %v591, 7
        %v593 = vsub.s32 %v590, %v592
        %v594 = vrot.slane %v586, %v593
        %v596 = vunpack.c.l.s4 1983009808
        %v597 = vunpack.c.0.s8 %v596
        %v598 = vlaneseq
        %v599 = vshrl.u32 %v598, 7
        %v600 = vsub.s32 %v597, %v599
        %v601 = vrot.slane %v587, %v600
        %v602 = vcombine.low %v546, %v562
        %v603 = vcombine.high %v546, %v562
        %v605 = vunpack.c.l.s4 1934713408
        %v606 = vunpack.c.0.s8 %v605
        %v607 = vlaneseq
        %v608 = vshrl.u32 %v607, 7
        %v609 = vsub.s32 %v606, %v608
        %v610 = vrot.slane %v602, %v609
        %v612 = vunpack.c.l.s4 1934713408
        %v613 = vunpack.c.0.s8 %v612
        %v614 = vlaneseq
        %v615 = vshrl.u32 %v614, 7
        %v616 = vsub.s32 %v613, %v615
        %v617 = vrot.slane %v603, %v616
        %v618 = vcombine.low %v553, %v569
        %v619 = vcombine.high %v553, %v569
        %v621 = vunpack.c.l.s4 1934713408
        %v622 = vunpack.c.0.s8 %v621
        %v623 = vlaneseq
        %v624 = vshrl.u32 %v623, 7
        %v625 = vsub.s32 %v622, %v624
        %v626 = vrot.slane %v618, %v625
        %v628 = vunpack.c.l.s4 1934713408
        %v629 = vunpack.c.0.s8 %v628
        %v630 = vlaneseq
        %v631 = vshrl.u32 %v630, 7
        %v632 = vsub.s32 %v629, %v631
        %v633 = vrot.slane %v619, %v632
        %v634 = vcombine.low %v578, %v594
        %v635 = vcombine.high %v578, %v594
        %v637 = vunpack.c.l.s4 1934713408
        %v638 = vunpack.c.0.s8 %v637
        %v639 = vlaneseq
        %v640 = vshrl.u32 %v639, 7
        %v641 = vsub.s32 %v638, %v640
        %v642 = vrot.slane %v634, %v641
        %v644 = vunpack.c.l.s4 1934713408
        %v645 = vunpack.c.0.s8 %v644
        %v646 = vlaneseq
        %v647 = vshrl.u32 %v646, 7
        %v648 = vsub.s32 %v645, %v647
        %v649 = vrot.slane %v635, %v648
        %v650 = vcombine.low %v585, %v601
        %v651 = vcombine.high %v585, %v601
        %v653 = vunpack.c.l.s4 1934713408
        %v654 = vunpack.c.0.s8 %v653
        %v655 = vlaneseq
        %v656 = vshrl.u32 %v655, 7
        %v657 = vsub.s32 %v654, %v656
        %v658 = vrot.slane %v650, %v657
        %v660 = vunpack.c.l.s4 1934713408
        %v661 = vunpack.c.0.s8 %v660
        %v662 = vlaneseq
        %v663 = vshrl.u32 %v662, 7
        %v664 = vsub.s32 %v661, %v663
        %v665 = vrot.slane %v651, %v664
        %v666 = vcombine.low %v610, %v642
        %v667 = vcombine.high %v610, %v642
        %v668 = vcombine.low %v617, %v649
        %v669 = vcombine.high %v617, %v649
        %v670 = vcombine.low %v626, %v658
        %v671 = vcombine.high %v626, %v658
        %v672 = vcombine.low %v633, %v665
        %v673 = vcombine.high %v633, %v665
        %674 = vst.msk [vmem:[%s215] sm:$0xff] %vm363, %v666
        %675 = vst.msk [vmem:[%s215 + $0x8] sm:$0xff] %vm363, %v667
        %676 = vst.msk [vmem:[%s215 + $0x10] sm:$0xff] %vm363, %v668
        %677 = vst.msk [vmem:[%s215 + $0x18] sm:$0xff] %vm363, %v669
        %678 = vst.msk [vmem:[%s215 + $0x20] sm:$0xff] %vm363, %v670
        %679 = vst.msk [vmem:[%s215 + $0x28] sm:$0xff] %vm363, %v671
        %680 = vst.msk [vmem:[%s215 + $0x30] sm:$0xff] %vm363, %v672
        %681 = vst.msk [vmem:[%s215 + $0x38] sm:$0xff] %vm363, %v673
        %s682 = sand.u32 %s118, 1
        %s683 = scalar_lea.sflag [#allocation5], %s682
        %s684 = sand.u32 %s118, 1
        %s685 = smul.addr %s684, 64
        %s686 = scalar_lea.vmem [#allocation6], %s685
        // Predicated region
        $region48: #{tpu_custom_call.1} parent=35 // pred_check
          %p687 = pneg %p128
        $region49: #{tpu_custom_call.1} parent=35 // pred_check_branch
          %689 = sbr.rel (%p687) target = $region51
        $region50: #{tpu_custom_call.1} parent=35 // pred_region
          %s691 = ssub.s32 1024, 1024
          %692 = vsyncadd %s683, %s691
          %s693 = smul.addr %s21, 8
          %s694 = smul.addr %s693, 128
          %s695 = scalar_lea.hbm %s4, %s694
          %s696 = sshll.u32 %s686, 4
          %s697 = int_to_ptr.vmem [resolvable:$true] %s696
          %702 = dma.vmem_to_hbm [thread:$0]  %s697, 1024, %s695, %s683, 128, 128, 8
        $region51: #{tpu_custom_call.1} parent=35 // pred_fallthru
          _
      $region36: #{tpu_custom_call.1} parent=5 // pred_fallthru
        _
      %p703 = scmp.le.s32.totalorder 2, %s16
      // Predicated region
      $region52: #{tpu_custom_call.1} parent=5 // pred_check
        %p704 = pneg %p703
      $region53: #{tpu_custom_call.1} parent=5 // pred_check_branch
        %706 = sbr.rel (%p704) target = $region55
      $region54: #{tpu_custom_call.1} parent=5 // pred_region
        %s707 = ssub.s32 %s16, 2
        // Predicated region
        $region56: #{tpu_custom_call.1} parent=54 // pred_check
          %p708 = pneg %p134
        $region57: #{tpu_custom_call.1} parent=54 // pred_check_branch
          %710 = sbr.rel (%p708) target = $region59
        $region58: #{tpu_custom_call.1} parent=54 // pred_region
          %s711 = sand.u32 %s119, 1
          %s712 = scalar_lea.sflag [#allocation5], %s711
          %s713 = sand.u32 %s119, 1
          %s714 = smul.addr %s713, 64
          %s715 = scalar_lea.vmem [#allocation6], %s714
          %716 = dma.done %s712, 1024
        $region59: #{tpu_custom_call.1} parent=54 // pred_fallthru
          _
      $region55: #{tpu_custom_call.1} parent=5 // pred_fallthru
        _
    $region6: #{tpu_custom_call.1} parent=1 // loop_footer
      %s20 = sadd.s32 1, %s16
    $region7: #{tpu_custom_call.1} parent=1 // loop_footer_branch
      %15 = sbr.rel target = $region3
    $region8: #{tpu_custom_call.1} parent=1 // loop_exit
      _
    %717 = vsyncpa [#allocation4], 1
    %s718 = scalar_lea.sflag [#allocation4], 1
    %719 = vsyncpa %s718, 1
    %720 = vsyncpa [#allocation5], 1
    %s721 = scalar_lea.sflag [#allocation5], 1
    %722 = vsyncpa %s721, 1

</llo_original>
